<compile_context>
chip_gen: v6e
topology: v6e:2x2x1
jax: 0.10.0
libtpu: 0.0.40
codegen_flags: <defaults>
</compile_context>

<pallas_src>
import jax
import jax.numpy as jnp
from jax import lax
from jax.experimental import pallas as pl
from jax.experimental.pallas import tpu as pltpu


def _contextnorm_kernel(x_ref, o_ref):
    # x_ref block: (TILE_B, C, TILE_HW). Reduce over axis=1 (the channel axis).
    # Two-pass statistics in f32: memory-bound op, so the extra VMEM read is
    # hidden, and it avoids the sumsq - C*mean^2 cancellation issue.
    x = x_ref[...].astype(jnp.float32)
    c = x.shape[1]
    mean = jnp.mean(x, axis=1, keepdims=True)
    diff = x - mean
    # PyTorch x.var() default is unbiased (correction=1): divide by (C - 1).
    # Note: C == 1 gives 0/0 -> NaN, matching PyTorch behavior.
    var = jnp.sum(diff * diff, axis=1, keepdims=True) / jnp.float32(c - 1)
    out = diff * lax.rsqrt(var + jnp.float32(1e-5))
    o_ref[...] = out.astype(o_ref.dtype)


def _largest_aligned_divisor(total, align, cap):
    """Largest multiple of `align` that divides `total` and is <= cap.

    Falls back to `align` if nothing smaller fits (block may exceed cap)."""
    best = align
    d = align
    while d <= total:
        if total % d == 0 and d <= cap:
            best = d
        d += align
    return best


def _largest_divisor_leq(n, cap):
    best = 1
    for d in range(1, n + 1):
        if n % d == 0 and d <= cap:
            best = d
    return best


def context_norm(x, *, tile_b=None, tile_hw=None, target_block_bytes=2 << 20):
    """x: NCHW array (B, C, H, W). Normalizes over dim=1 exactly like the torch module."""
    B, C, H, W = x.shape
    HW = H * W
    itemsize = jnp.dtype(x.dtype).itemsize

    x_flat = x.reshape(B, C, HW)

    # Pad the spatial axis up to a multiple of 128 -> lane-dense, unmasked stores.
    HW_pad = ((HW + 127) // 128) * 128
    if HW_pad != HW:
        x_flat = jnp.pad(x_flat, ((0, 0), (0, 0), (0, HW_pad - HW)))

    # ---- auto tile selection (can be overridden) -------------------------
    row_bytes = max(C * itemsize, 1)
    if tile_hw is None:
        cap_hw = max(128, target_block_bytes // row_bytes)
        tile_hw = _largest_aligned_divisor(HW_pad, 128, cap_hw)
    assert HW_pad % tile_hw == 0 and tile_hw % 128 == 0, "tile_hw must be a 128-multiple divisor of padded H*W"

    if tile_b is None:
        cap_b = max(1, target_block_bytes // (row_bytes * tile_hw))
        tile_b = _largest_divisor_leq(B, cap_b)
    assert B % tile_b == 0, "tile_b must divide B"

    # Megacore (v7x has 2 TCs): prefer >= 2 grid steps when the problem allows it.
    if (B // tile_b) * (HW_pad // tile_hw) < 2:
        if B >= 2:
            tile_b = _largest_divisor_leq(B, B // 2)
        elif HW_pad // 128 >= 2:
            tile_hw = _largest_aligned_divisor(HW_pad, 128, tile_hw // 2)

    grid = (B // tile_b, HW_pad // tile_hw)

    # ---- VMEM budget: double-buffered in+out blocks + f32 temporaries ----
    block_in_bytes = tile_b * C * tile_hw * itemsize
    f32_tmp_bytes = tile_b * C * tile_hw * 4
    vmem_est = 2 * 2 * block_in_bytes + 4 * f32_tmp_bytes
    # 32 MiB floor (above v5e's 16 MiB scoped default), 48 MiB cap (safe on
    # v7x's 64 MiB physical VMEM).
    vmem_limit = min(48 << 20, max(32 << 20, int(vmem_est * 5 // 4)))

    out_flat = pl.pallas_call(
        _contextnorm_kernel,
        out_shape=jax.ShapeDtypeStruct((B, C, HW_pad), x.dtype),
        grid_spec=pltpu.PrefetchScalarGridSpec(
            num_scalar_prefetch=0,
            grid=grid,
            in_specs=[pl.BlockSpec((tile_b, C, tile_hw), lambda b, t: (b, 0, t))],
            out_specs=pl.BlockSpec((tile_b, C, tile_hw), lambda b, t: (b, 0, t)),
        ),
        compiler_params=pltpu.CompilerParams(
            dimension_semantics=("parallel", "parallel"),
            vmem_limit_bytes=vmem_limit,
        ),
    )(x_flat)

    if HW_pad != HW:
        out_flat = out_flat[:, :, :HW]
    return out_flat.reshape(B, C, H, W)


def _context_norm_ref(x):
    x32 = x.astype(jnp.float32)
    mean = jnp.mean(x32, axis=1, keepdims=True)
    var = jnp.sum((x32 - mean) ** 2, axis=1, keepdims=True) / (x.shape[1] - 1)
    return ((x32 - mean) / jnp.sqrt(var + 1e-5)).astype(x.dtype)


if __name__ == "__main__":
    key = jax.random.PRNGKey(0)
    B, C, H, W = 2, 4, 16, 16
    x = jax.random.normal(key, (B, C, H, W), dtype=jnp.float32)

    out = context_norm(x)
    out = jax.block_until_ready(out)

    ref = _context_norm_ref(x)
    assert out.shape == (B, C, H, W)
    assert jnp.allclose(out, ref, atol=1e-5, rtol=1e-5), "mismatch vs reference"

    # Sanity check on a non-128-aligned spatial size (exercises the pad/slice path).
    x2 = jax.random.normal(jax.random.PRNGKey(1), (3, 6, 10, 10), dtype=jnp.float32)
    out2 = jax.block_until_ready(context_norm(x2))
    assert jnp.allclose(out2, _context_norm_ref(x2), atol=1e-5, rtol=1e-5), "mismatch (padded path)"

    print("KERNEL_OK")
</pallas_src>

<mosaic_0001>
module attributes {stable_mosaic.version = 11 : i64} {
  func.func @_contextnorm_kernel(%arg0: i32, %arg1: i32, %arg2: memref<1x4x256xf32, #tpu.memory_space<vmem>>, %arg3: memref<1x4x256xf32, #tpu.memory_space<vmem>>) attributes {dimension_semantics = [#tpu.dimension_semantics<parallel>, #tpu.dimension_semantics<parallel>], iteration_bounds = array<i64: 2, 1>, scalar_prefetch = 0 : i64, scratch_operands = 0 : i64, tpu.core_type = #tpu.core_type<tc>, window_params = [{transform_indices = @transform_0, window_bounds = array<i64: 1, 4, 256>}, {transform_indices = @transform_1, window_bounds = array<i64: 1, 4, 256>}]} {
    %c0 = arith.constant 0 : index
    %c0_0 = arith.constant 0 : index
    %c0_1 = arith.constant 0 : index
    %0 = vector.load %arg2[%c0, %c0_0, %c0_1] : memref<1x4x256xf32, #tpu.memory_space<vmem>>, vector<1x4x256xf32>
    %cst = arith.constant dense<0.000000e+00> : vector<1x256xf32>
    %1 = vector.multi_reduction <add>, %0, %cst [1] : vector<1x4x256xf32> to vector<1x256xf32>
    %2 = vector.shape_cast %1 : vector<1x256xf32> to vector<1x1x256xf32>
    %cst_2 = arith.constant 4.000000e+00 : f32
    %3 = vector.broadcast %cst_2 : f32 to vector<1x1x256xf32>
    %4 = arith.divf %2, %3 : vector<1x1x256xf32>
    %5 = vector.broadcast %4 : vector<1x1x256xf32> to vector<1x4x256xf32>
    %6 = arith.subf %0, %5 : vector<1x4x256xf32>
    %7 = arith.mulf %6, %6 : vector<1x4x256xf32>
    %cst_3 = arith.constant dense<0.000000e+00> : vector<1x256xf32>
    %8 = vector.multi_reduction <add>, %7, %cst_3 [1] : vector<1x4x256xf32> to vector<1x256xf32>
    %9 = vector.shape_cast %8 : vector<1x256xf32> to vector<1x1x256xf32>
    %cst_4 = arith.constant 3.000000e+00 : f32
    %10 = vector.broadcast %cst_4 : f32 to vector<1x1x256xf32>
    %11 = arith.divf %9, %10 : vector<1x1x256xf32>
    %cst_5 = arith.constant 9.99999974E-6 : f32
    %12 = vector.broadcast %cst_5 : f32 to vector<1x1x256xf32>
    %13 = arith.addf %11, %12 : vector<1x1x256xf32>
    %14 = math.rsqrt %13 : vector<1x1x256xf32>
    %15 = vector.broadcast %14 : vector<1x1x256xf32> to vector<1x4x256xf32>
    %16 = arith.mulf %6, %15 : vector<1x4x256xf32>
    %c0_6 = arith.constant 0 : index
    %c0_7 = arith.constant 0 : index
    %c0_8 = arith.constant 0 : index
    %17 = vector.load %arg3[%c0_6, %c0_7, %c0_8] : memref<1x4x256xf32, #tpu.memory_space<vmem>>, vector<1x4x256xf32>
    tpu.vector_store %arg3[%c0_6, %c0_7, %c0_8], %16 {strides = array<i32>} : memref<1x4x256xf32, #tpu.memory_space<vmem>>, vector<1x4x256xf32>,
    return
  }
  func.func @transform_0(%arg0: i32, %arg1: i32) -> (i32, i32, i32) {
    %c0_i32 = arith.constant 0 : i32
    %c0_i32_0 = arith.constant 0 : i32
    return %arg0, %c0_i32, %arg1 : i32, i32, i32
  }
  func.func @transform_1(%arg0: i32, %arg1: i32) -> (i32, i32, i32) {
    %c0_i32 = arith.constant 0 : i32
    %c0_i32_0 = arith.constant 0 : i32
    return %arg0, %c0_i32, %arg1 : i32, i32, i32
  }
}

</mosaic_0001>

<llo_original>
// kernel: tpu_custom_call.1
$region0: #{tpu_custom_call.1}
  #allocation0 [shape = 'u32[]', space=smem, size = 0x4, offset = 0x4, fixed_abs, tag = 'smem constant byte address 0x4 - core index']
  #allocation1 [shape = 'u32[144,128]{1,0:T(1,128)}', space=vmem, size = 0x12000, scoped, tag = 'internal scratch']
  %s0 = inlined_call_operand.hbm [shape: f32[2,4,256], index: 0, kind: input, shape index: {}]
  %s1 = inlined_call_operand.hbm [shape: f32[2,4,256], index: 1, kind: output, shape index: {}]
  %s2 = sld [smem:[#allocation0]]
  $region41: #{tpu_custom_call.1} parent=0
    _
  %s4 = ssub.s32 1, %s2
  %s5 = scalar_select 0, %s4, %s2
  $region1: #{tpu_custom_call.1} parent=0
    #allocation2 [shape = 'u8[8192]{0}', space=vmem, size = 0x2000, scoped, tag = 'input window, operand 0']
    #allocation3 [shape = 's32[2]{0}', space=sflag, size = 0x8, scoped, tag = 'scoped memory for tpu_custom_call.1']
    #allocation4 [shape = 's32[2]{0}', space=sflag, size = 0x8, scoped, tag = 'scoped memory for tpu_custom_call.1']
    #allocation5 [shape = 'u8[8192]{0}', space=vmem, size = 0x2000, scoped, tag = 'output window, operand 0']
    %6 = vsyncpa [#allocation3], 0
    %s7 = scalar_lea.sflag [#allocation3], 1
    %8 = vsyncpa %s7, 0
    %9 = vsyncpa [#allocation4], 0
    %s10 = scalar_lea.sflag [#allocation4], 1
    %11 = vsyncpa %s10, 0
    loop: start=0, step=1, limit=4
    $region2: #{tpu_custom_call.1} parent=1 // loop_pre_header
      _
    $region3: #{tpu_custom_call.1} parent=1 // loop_header
      %s13 = sphi 0, %s17
      %p14 = scmp.ge.s32.totalorder %s13, 4
      %s20 = sphi 0, %s32
      %s21 = sphi 0, %s28
      %s22 = sphi 0, %s20
      %s23 = sphi 0, %s21
      %s24 = sphi 0, %s22
      %s25 = sphi 0, %s23
      %s37 = sphi 0, %s39
      %s40 = sphi 0, %s37
      %s41 = sphi 0, %s40
      %s57 = sphi 0, %s41
      %s65 = sphi 0, %s67
      %s68 = sphi 0, %s65
      %s69 = sphi 0, %s68
      %s85 = sphi 0, %s69
    $region4: #{tpu_custom_call.1} parent=1 // loop_header_branch
      %16 = sbr.rel (%p14) target = $region8
    $region5: #{tpu_custom_call.1} parent=1 // loop_body
      %s18 = ssub.s32 %s13, 1
      %s19 = ssub.s32 %s13, 2
      %s26 = sadd.s32 1, %s21
      %p27 = scmp.ge.s32.totalorder %s26, 1
      %s28 = scalar_select %p27, 0, %s26
      %s29 = sadd.s32 1, %s20
      %s30 = scalar_select %p27, %s29, %s20
      %p31 = scmp.ge.s32.totalorder %s30, 2
      %s32 = scalar_select %p31, 0, %s30
      %s33 = ssub.s32 %s20, %s32
      %s34 = ssub.s32 %s21, %s28
      %s35 = sor.u32 %s33, %s34
      %p36 = scmp.eq.s32.totalorder %s35, 0
      %s38 = sadd.s32 %s37, 1
      %s39 = scalar_select %p36, %s37, %s38
      %p42 = pneg %p36
      %p43 = scmp.eq.s32.totalorder %s13, 1
      %p44 = por %p42, %p43
      %p45 = scmp.ne.s32.totalorder %s37, %s40
      %p46 = scmp.eq.s32.totalorder %s13, 0
      %p47 = por %p45, %p46
      %p48 = scmp.ne.s32.totalorder %s37, %s40
      %p49 = scmp.eq.s32.totalorder %s18, 1
      %p50 = por %p48, %p49
      %p51 = scmp.ne.s32.totalorder %s40, %s41
      %p52 = scmp.eq.s32.totalorder %s18, 0
      %p53 = por %p51, %p52
      %p54 = scmp.ne.s32.totalorder %s40, %s41
      %p55 = scmp.eq.s32.totalorder %s19, 1
      %p56 = por %p54, %p55
      %p58 = scmp.ne.s32.totalorder %s41, %s57
      %p59 = scmp.eq.s32.totalorder %s19, 0
      %p60 = por %p58, %p59
      %s61 = ssub.s32 %s20, %s32
      %s62 = ssub.s32 %s21, %s28
      %s63 = sor.u32 %s61, %s62
      %p64 = scmp.eq.s32.totalorder %s63, 0
      %s66 = sadd.s32 %s65, 1
      %s67 = scalar_select %p64, %s65, %s66
      %p70 = pneg %p64
      %p71 = scmp.eq.s32.totalorder %s13, 1
      %p72 = por %p70, %p71
      %p73 = scmp.ne.s32.totalorder %s65, %s68
      %p74 = scmp.eq.s32.totalorder %s13, 0
      %p75 = por %p73, %p74
      %p76 = scmp.ne.s32.totalorder %s65, %s68
      %p77 = scmp.eq.s32.totalorder %s18, 1
      %p78 = por %p76, %p77
      %p79 = scmp.ne.s32.totalorder %s68, %s69
      %p80 = scmp.eq.s32.totalorder %s18, 0
      %p81 = por %p79, %p80
      %p82 = scmp.ne.s32.totalorder %s68, %s69
      %p83 = scmp.eq.s32.totalorder %s19, 1
      %p84 = por %p82, %p83
      %p86 = scmp.ne.s32.totalorder %s69, %s85
      %p87 = scmp.eq.s32.totalorder %s19, 0
      %p88 = por %p86, %p87
      %p89 = scmp.le.s32.totalorder 1, %s13
      %p90 = scmp.lt.s32.totalorder %s13, 3
      %p91 = pnand %p89, %p90
      %p92 = pneg %p91
      // Predicated region
      $region9: #{tpu_custom_call.1} parent=5 // pred_check
        _
      $region10: #{tpu_custom_call.1} parent=5 // pred_check_branch
        %94 = sbr.rel (%p91) target = $region12
      $region11: #{tpu_custom_call.1} parent=5 // pred_region
        %s95 = ssub.s32 %s13, 1
      $region12: #{tpu_custom_call.1} parent=5 // pred_fallthru
        _
      %p96 = scmp.lt.s32.totalorder %s13, 2
      // Predicated region
      $region13: #{tpu_custom_call.1} parent=5 // pred_check
        %p97 = pneg %p96
      $region14: #{tpu_custom_call.1} parent=5 // pred_check_branch
        %99 = sbr.rel (%p97) target = $region16
      $region15: #{tpu_custom_call.1} parent=5 // pred_region
        // Predicated region
        $region17: #{tpu_custom_call.1} parent=15 // pred_check
          %p100 = pneg %p47
        $region18: #{tpu_custom_call.1} parent=15 // pred_check_branch
          %102 = sbr.rel (%p100) target = $region20
        $region19: #{tpu_custom_call.1} parent=15 // pred_region
          %s103 = sand.u32 %s37, 1
          %s104 = scalar_lea.sflag [#allocation3], %s103
          %s105 = sand.u32 %s37, 1
          %s106 = smul.addr %s105, 8
          %s107 = scalar_lea.vmem [#allocation2], %s106
          %s108 = smul.u32 2, %s21
          %s110 = ssub.s32 128, 128
          %111 = vsyncadd %s104, %s110
          %s112 = smul.addr %s20, 2
          %s113 = sadd.s32 %s108, %s112
          %s114 = smul.addr %s113, 64
          %s115 = scalar_lea.hbm %s0, %s114
          %s117 = sshll.u32 %s107, 4
          %s118 = int_to_ptr.vmem [resolvable:$true] %s117
          %120 = dma.hbm_to_vmem [thread:$0]  %s115, 128, %s118, %s104
        $region20: #{tpu_custom_call.1} parent=15 // pred_fallthru
          _
      $region16: #{tpu_custom_call.1} parent=5 // pred_fallthru
        _
      %p121 = scmp.le.s32.totalorder 1, %s13
      %p122 = scmp.lt.s32.totalorder %s13, 3
      %p123 = pnand %p121, %p122
      %p124 = pneg %p123
      // Predicated region
      $region21: #{tpu_custom_call.1} parent=5 // pred_check
        _
      $region22: #{tpu_custom_call.1} parent=5 // pred_check_branch
        %126 = sbr.rel (%p123) target = $region24
      $region23: #{tpu_custom_call.1} parent=5 // pred_region
        %s127 = ssub.s32 %s13, 1
        %s128 = sand.u32 %s40, 1
        %s129 = scalar_lea.sflag [#allocation3], %s128
        %s130 = sand.u32 %s40, 1
        %s131 = smul.addr %s130, 8
        %s132 = scalar_lea.vmem [#allocation2], %s131
        // Predicated region
        $region25: #{tpu_custom_call.1} parent=23 // pred_check
          %p133 = pneg %p53
        $region26: #{tpu_custom_call.1} parent=23 // pred_check_branch
          %135 = sbr.rel (%p133) target = $region28
        $region27: #{tpu_custom_call.1} parent=23 // pred_region
          %136 = dma.done %s129, 128
        $region28: #{tpu_custom_call.1} parent=23 // pred_fallthru
          _
        %s137 = sand.u32 %s40, 1
        %s138 = scalar_lea.sflag [#allocation3], %s137
        %s139 = sand.u32 %s40, 1
        %s140 = smul.addr %s139, 8
        %s141 = scalar_lea.vmem [#allocation2], %s140
        %p142 = pneg %p53
        %p143 = pneg %p50
        %p144 = pneg %p81
        %p145 = pneg %p78
        %s146 = sand.u32 %s68, 1
        %s147 = scalar_lea.sflag [#allocation4], %s146
        %s148 = sand.u32 %s68, 1
        %s149 = smul.addr %s148, 8
        %s150 = scalar_lea.vmem [#allocation5], %s149
        %s151 = smul.u32 2, %s23
        %s152 = smul.u32 2, %s23
        %v153 = vld [vmem:[%s132] sm:$0xff]
        %v155 = vcombine.high %v153, %v153
        %vm157 = vcmask 1043456
        %v158 = vsel %vm157, %v153, 0.0
        %v159 = vrot.slane %v158, 4
        %v160 = vadd.f32 %v158, %v159
        %v161 = vrot.slane %v160, 2
        %v162 = vadd.f32 %v160, %v161
        %v163 = vrot.slane %v162, 1
        %v164 = vadd.f32 %v162, %v163
        %v165 = vsel %vm157, %v155, 0.0
        %v166 = vrot.slane %v165, 4
        %v167 = vadd.f32 %v165, %v166
        %v168 = vrot.slane %v167, 2
        %v169 = vadd.f32 %v167, %v168
        %v170 = vrot.slane %v169, 1
        %v171 = vadd.f32 %v169, %v170
        %v172 = vrcp.pop 4.0
        %v173 = vmul.f32 %v164, %v172
        %v174 = vmul.f32 %v171, %v172
        %v177 = vcombine.low %v173, %v174
        %v179 = vsub.f32 %v153, %v177
        %v180 = vmul.f32 %v179, %v179
        %v182 = vcombine.high %v180, %v180
        %v184 = vsel %vm157, %v180, 0.0
        %v185 = vrot.slane %v184, 4
        %v186 = vadd.f32 %v184, %v185
        %v187 = vrot.slane %v186, 2
        %v188 = vadd.f32 %v186, %v187
        %v189 = vrot.slane %v188, 1
        %v190 = vadd.f32 %v188, %v189
        %v191 = vsel %vm157, %v182, 0.0
        %v192 = vrot.slane %v191, 4
        %v193 = vadd.f32 %v191, %v192
        %v194 = vrot.slane %v193, 2
        %v195 = vadd.f32 %v193, %v194
        %v196 = vrot.slane %v195, 1
        %v197 = vadd.f32 %v195, %v196
        %v198 = vrcp.pop 3.0
        %v199 = vmul.f32 %v190, %v198
        %v200 = vmul.f32 %v197, %v198
        %v201 = vadd.f32 %v199, 1e-05
        %v202 = vadd.f32 %v200, 1e-05
        %v203 = vrsqrt.pop %v201
        %v204 = vrsqrt.pop %v202
        %v207 = vcombine.low %v203, %v204
        %v209 = vmul.f32 %v179, %v207
        %210 = vst [vmem:[%s150] sm:$0xff] %v209
        %s211 = sand.u32 %s68, 1
        %s212 = scalar_lea.sflag [#allocation4], %s211
        %s213 = sand.u32 %s68, 1
        %s214 = smul.addr %s213, 8
        %s215 = scalar_lea.vmem [#allocation5], %s214
        // Predicated region
        $region29: #{tpu_custom_call.1} parent=23 // pred_check
          %p216 = pneg %p78
        $region30: #{tpu_custom_call.1} parent=23 // pred_check_branch
          %218 = sbr.rel (%p216) target = $region32
        $region31: #{tpu_custom_call.1} parent=23 // pred_region
          %s219 = smul.u32 2, %s23
          %s221 = ssub.s32 128, 128
          %222 = vsyncadd %s212, %s221
          %s223 = smul.addr %s22, 2
          %s224 = sadd.s32 %s219, %s223
          %s225 = smul.addr %s224, 64
          %s226 = scalar_lea.hbm %s1, %s225
          %s228 = sshll.u32 %s215, 4
          %s229 = int_to_ptr.vmem [resolvable:$true] %s228
          %231 = dma.vmem_to_hbm [thread:$0]  %s229, 128, %s226, %s212
        $region32: #{tpu_custom_call.1} parent=23 // pred_fallthru
          _
      $region24: #{tpu_custom_call.1} parent=5 // pred_fallthru
        _
      %p232 = scmp.le.s32.totalorder 2, %s13
      // Predicated region
      $region33: #{tpu_custom_call.1} parent=5 // pred_check
        %p233 = pneg %p232
      $region34: #{tpu_custom_call.1} parent=5 // pred_check_branch
        %235 = sbr.rel (%p233) target = $region36
      $region35: #{tpu_custom_call.1} parent=5 // pred_region
        %s236 = ssub.s32 %s13, 2
        // Predicated region
        $region37: #{tpu_custom_call.1} parent=35 // pred_check
          %p237 = pneg %p84
        $region38: #{tpu_custom_call.1} parent=35 // pred_check_branch
          %239 = sbr.rel (%p237) target = $region40
        $region39: #{tpu_custom_call.1} parent=35 // pred_region
          %s240 = sand.u32 %s69, 1
          %s241 = scalar_lea.sflag [#allocation4], %s240
          %s242 = sand.u32 %s69, 1
          %s243 = smul.addr %s242, 8
          %s244 = scalar_lea.vmem [#allocation5], %s243
          %245 = dma.done %s241, 128
        $region40: #{tpu_custom_call.1} parent=35 // pred_fallthru
          _
      $region36: #{tpu_custom_call.1} parent=5 // pred_fallthru
        _
    $region6: #{tpu_custom_call.1} parent=1 // loop_footer
      %s17 = sadd.s32 1, %s13
    $region7: #{tpu_custom_call.1} parent=1 // loop_footer_branch
      %12 = sbr.rel target = $region3
    $region8: #{tpu_custom_call.1} parent=1 // loop_exit
      _
    %246 = vsyncpa [#allocation3], 1
    %s247 = scalar_lea.sflag [#allocation3], 1
    %248 = vsyncpa %s247, 1
    %249 = vsyncpa [#allocation4], 1
    %s250 = scalar_lea.sflag [#allocation4], 1
    %251 = vsyncpa %s250, 1

</llo_original>
